<compile_context>
chip_gen: v5e
topology: v5e:2x2
jax: 0.10.0
libtpu: 0.0.40
codegen_flags: <defaults>
</compile_context>

<pallas_src>
import functools
import numpy as np
import jax
import jax.numpy as jnp
from jax.experimental import pallas as pl
from jax.experimental.pallas import tpu as pltpu

FILTER_LENGTH = 20                   # n_fft
HOP_LENGTH = 5
WIN_LENGTH = 20
N_FREQ = FILTER_LENGTH // 2 + 1      # 11 (onesided)
HALF = FILTER_LENGTH // 2            # 10
R_SUB = FILTER_LENGTH // HOP_LENGTH  # 4 hop-blocks per frame


def _cdiv(a, b):
    return (a + b - 1) // b


def _round_up(a, b):
    return _cdiv(a, b) * b


# ----------------------------------------------------------------------------
# Deterministic "parameters": DFT / inverse-DFT bases (window folded in),
# their trace-time combination, and the squared window.  All float64 -> f32.
# ----------------------------------------------------------------------------
def _hann_periodic(n):
    k = np.arange(n)
    return (0.5 - 0.5 * np.cos(2.0 * np.pi * k / n)).astype(np.float64)


def _make_bases():
    N = FILTER_LENGTH
    n = np.arange(N, dtype=np.float64)
    f = np.arange(N_FREQ, dtype=np.float64)
    omega = 2.0 * np.pi * np.outer(f, n) / N                  # (n_freq, n_fft)
    w = _hann_periodic(N)

    # Analysis (windowed rDFT):  spec = bfwd @ frames   (rows: Re then Im)
    bfwd = np.concatenate([np.cos(omega) * w[None, :],
                           -np.sin(omega) * w[None, :]], axis=0)   # (22, 20)

    # Synthesis (irfft + synthesis window):  tframes = binv @ spec
    coef = np.full((N_FREQ,), 2.0)
    coef[0] = 1.0
    coef[-1] = 1.0
    cinv = coef[None, :] * np.cos(omega.T) / N                # (20, 11)
    sinv = -coef[None, :] * np.sin(omega.T) / N               # (20, 11)
    binv = np.concatenate([cinv, sinv], axis=1) * w[:, None]  # (20, 22)

    bcomb = binv @ bfwd                                       # (20, 20) ~= diag(w^2)
    wsq = w * w
    return (bfwd.astype(np.float32), binv.astype(np.float32),
            bcomb.astype(np.float32), wsq.astype(np.float32))


# ----------------------------------------------------------------------------
# Fused Pallas kernel: hop-blocked signal tile -> frames -> spectrum ->
# (optional mag/phase) -> windowed time frames -> overlap-add -> /OLA(w^2).
# ----------------------------------------------------------------------------
def _fused_kernel(slab_ref, bc_ref, bfc_ref, bfs_ref, bic_ref, bis_ref,
                  wsqk_ref, out_ref, fr_ref, tfr_ref, *,
                  tile_f, n_frames, exact_mag_phase):
    # slab_ref : (HOP, win_w)   hop-blocked padded signal; local block g holds
    #            xpad hop-block (c0 - 1 + g), c0 = tile's first output block.
    # out_ref  : (HOP, tile_f)  final signal, out[p, j] = y[(c0+j)*hop + p].
    U = tile_f + R_SUB - 1                        # local frames c0-1 .. c0+tile_f+1
    win = slab_ref[...]                           # (5, win_w) f32

    # Assemble the (20, U) frame matrix in a VMEM scratch:
    #   frames[k*hop + p, u] = xpad[(c0 - 1 + u + k)*hop + p] = win[p, u + k]
    for k in range(R_SUB):
        fr_ref[k * HOP_LENGTH:(k + 1) * HOP_LENGTH, :] = win[:, k:k + U]
    frames = fr_ref[...]                          # (20, U) f32

    if exact_mag_phase:
        # torch's mag/phase round trip, via the rsqrt identity (no atan2/cos/sin).
        re = jnp.dot(bfc_ref[...], frames, preferred_element_type=jnp.float32)
        im = jnp.dot(bfs_ref[...], frames, preferred_element_type=jnp.float32)
        r2 = re * re + im * im
        inv_mag = jax.lax.rsqrt(r2 + 1e-30)
        mag = r2 * inv_mag                        # = |spec|
        re2 = mag * (re * inv_mag)                # = mag * cos(phase)
        im2 = mag * (im * inv_mag)                # = mag * sin(phase)
        tfr_ref[...] = (
            jnp.dot(bic_ref[...], re2, preferred_element_type=jnp.float32)
            + jnp.dot(bis_ref[...], im2, preferred_element_type=jnp.float32))
    else:
        # One MXU pass: B_comb = binv @ bfwd, precomputed at trace time.
        tfr_ref[...] = jnp.dot(bc_ref[...], frames,
                               preferred_element_type=jnp.float32)

    # Overlap-add + OLA(window^2) normalisation for output blocks [c0, c0+tile_f).
    c0 = pl.program_id(1) * tile_f
    gj = c0 + jax.lax.broadcasted_iota(jnp.int32, (1, tile_f), 1)   # global block
    acc = jnp.zeros((HOP_LENGTH, tile_f), jnp.float32)
    env = jnp.zeros((HOP_LENGTH, tile_f), jnp.float32)
    for k in range(R_SUB):
        f_glob = gj + (2 - k)                     # contributing frame index
        m = ((f_glob >= 0) & (f_glob <= n_frames - 1)).astype(jnp.float32)
        piece = tfr_ref[k * HOP_LENGTH:(k + 1) * HOP_LENGTH,
                        (R_SUB - 1 - k):(R_SUB - 1 - k) + tile_f]   # (5, tile_f)
        acc = acc + m * piece
        env = env + m * wsqk_ref[k]               # (5,1) * (1,tile_f)
    out_ref[...] = acc * jnp.where(env > 1e-8, 1.0 / env, 0.0)


# ----------------------------------------------------------------------------
# Wrapper: TorchSTFT2D.forward
# ----------------------------------------------------------------------------
def torch_stft2d_forward(x, *, exact_mag_phase=False, max_tile_f=8192):
    """x: (B, T) float32 audio -> (B, 1, T_out) float32 reconstruction."""
    x = x.astype(jnp.float32)
    B, T = x.shape
    if T < HALF + 1:
        raise ValueError(f"reflect padding needs T >= {HALF + 1}, got {T}")

    F = T // HOP_LENGTH + 1                       # number of STFT frames
    n_out = F - 1                                 # output hop-blocks
    G = F + R_SUB - 1                             # hop-blocks of padded signal used

    # ---- tiling over output hop-blocks (lane axis) -------------------------
    n_tiles = max(1, _cdiv(n_out, max_tile_f))
    if B == 1 and n_tiles == 1 and n_out > 256:
        n_tiles = 2                               # keep both v7x TensorCores busy
    tile_f = _round_up(_cdiv(n_out, n_tiles), 128)
    n_tiles = _cdiv(n_out, tile_f)
    Fp_out = n_tiles * tile_f
    win_w = tile_f + 2 * R_SUB                    # +1 left / +5 right halo (+pad)

    # ---- hop-blocked, transposed, halo'd padded signal (XLA glue, ~1x data) -
    xp = jnp.pad(x, ((0, 0), (HALF, HALF)), mode="reflect")        # center=True
    xpb = xp[:, :G * HOP_LENGTH].reshape(B, G, HOP_LENGTH)
    xpb = jnp.transpose(xpb, (0, 2, 1))                            # (B, 5, G)
    total_blocks = Fp_out + 2 * R_SUB
    xpb0 = jnp.pad(xpb, ((0, 0), (0, 0), (1, total_blocks - G - 1)))
    # per-tile overlapping windows (halo duplication: 8 blocks per tile)
    slab = jnp.stack(
        [xpb0[:, :, i * tile_f:i * tile_f + win_w] for i in range(n_tiles)],
        axis=1)                                                    # (B, nt, 5, win_w)

    # ---- tiny constant bases ------------------------------------------------
    bfwd_np, binv_np, bcomb_np, wsq_np = _make_bases()
    bc = jnp.asarray(bcomb_np)                                     # (20, 20)
    bfc = jnp.asarray(bfwd_np[:N_FREQ])                            # (11, 20)
    bfs = jnp.asarray(bfwd_np[N_FREQ:])                            # (11, 20)
    bic = jnp.asarray(binv_np[:, :N_FREQ])                         # (20, 11)
    bis = jnp.asarray(binv_np[:, N_FREQ:])                         # (20, 11)
    wsqk = jnp.asarray(wsq_np.reshape(R_SUB, HOP_LENGTH, 1))       # (4, 5, 1)

    U = tile_f + R_SUB - 1
    kernel = functools.partial(_fused_kernel, tile_f=tile_f, n_frames=F,
                               exact_mag_phase=exact_mag_phase)

    out = pl.pallas_call(
        kernel,
        grid=(B, n_tiles),
        out_shape=jax.ShapeDtypeStruct((B, HOP_LENGTH, Fp_out), jnp.float32),
        in_specs=[
            pl.BlockSpec((None, None, HOP_LENGTH, win_w), lambda b, i: (b, i, 0, 0)),
            pl.BlockSpec((FILTER_LENGTH, FILTER_LENGTH), lambda b, i: (0, 0)),
            pl.BlockSpec((N_FREQ, FILTER_LENGTH), lambda b, i: (0, 0)),
            pl.BlockSpec((N_FREQ, FILTER_LENGTH), lambda b, i: (0, 0)),
            pl.BlockSpec((FILTER_LENGTH, N_FREQ), lambda b, i: (0, 0)),
            pl.BlockSpec((FILTER_LENGTH, N_FREQ), lambda b, i: (0, 0)),
            pl.BlockSpec((R_SUB, HOP_LENGTH, 1), lambda b, i: (0, 0, 0)),
        ],
        out_specs=pl.BlockSpec((None, HOP_LENGTH, tile_f), lambda b, i: (b, 0, i)),
        scratch_shapes=[
            pltpu.VMEM((FILTER_LENGTH, U), jnp.float32),   # assembled frames
            pltpu.VMEM((FILTER_LENGTH, U), jnp.float32),   # windowed time frames
        ],
        compiler_params=pltpu.CompilerParams(
            dimension_semantics=("parallel", "parallel"),
            vmem_limit_bytes=32 * 1024 * 1024),
    )(slab, bc, bfc, bfs, bic, bis, wsqk)                          # (B, 5, Fp_out)

    # TODO(synk): the final hop-phase interleave (B,5,n_out) -> (B,n_out*5)
    # (sample ordering) stays in XLA glue; it is a pure 1x-data transpose.
    y = out[:, :, :n_out]
    y = jnp.transpose(y, (0, 2, 1)).reshape(B, n_out * HOP_LENGTH)
    return y[:, None, :]                                           # .unsqueeze(-2)


# ----------------------------------------------------------------------------
# Independent pure-JAX reference (explicit frames / two f32 dots / scatter OLA)
# ----------------------------------------------------------------------------
def _reference_forward(x, *, exact_mag_phase=False):
    x = x.astype(jnp.float32)
    B, T = x.shape
    bfwd_np, binv_np, _, _ = _make_bases()
    w = _hann_periodic(FILTER_LENGTH)

    xp = jnp.pad(x, ((0, 0), (HALF, HALF)), mode="reflect")
    Tp = T + 2 * HALF
    F = (Tp - FILTER_LENGTH) // HOP_LENGTH + 1
    idx = (np.arange(F)[:, None] * HOP_LENGTH
           + np.arange(FILTER_LENGTH)[None, :])
    frames = xp[:, idx]                                            # (B, F, 20)
    spec = jnp.einsum("cn,bfn->bcf", jnp.asarray(bfwd_np), frames)  # (B, 22, F)
    if exact_mag_phase:
        re, im = spec[:, :N_FREQ], spec[:, N_FREQ:]
        mag = jnp.sqrt(re * re + im * im)
        ph = jnp.arctan2(im, re)
        spec = jnp.concatenate([mag * jnp.cos(ph), mag * jnp.sin(ph)], axis=1)
    tfr = jnp.einsum("nc,bcf->bfn", jnp.asarray(binv_np), spec)    # (B, F, 20)

    G = F + R_SUB - 1
    y = jnp.zeros((B, G, HOP_LENGTH), jnp.float32)
    t4 = tfr.reshape(B, F, R_SUB, HOP_LENGTH)
    for k in range(R_SUB):
        y = y.at[:, k:k + F, :].add(t4[:, :, k, :])
    y = y.reshape(B, G * HOP_LENGTH)

    wsq = w * w
    total = FILTER_LENGTH + HOP_LENGTH * (F - 1)
    env = np.zeros(total, dtype=np.float64)
    for f in range(F):
        env[f * HOP_LENGTH:f * HOP_LENGTH + FILTER_LENGTH] += wsq
    env = jnp.asarray(env[HALF:total - HALF].astype(np.float32))
    y = y[:, HALF:total - HALF] / env[None, :]
    return y[:, None, :]


if __name__ == "__main__":
    key = jax.random.PRNGKey(0)
    k1, k2, k3 = jax.random.split(key, 3)

    fwd = jax.jit(torch_stft2d_forward,
                  static_argnames=("exact_mag_phase", "max_tile_f"))

    # 1) small case: single lane tile per batch.
    B, T = 2, 160
    x = jax.random.normal(k1, (B, T), dtype=jnp.float32)
    out = fwd(x)
    jax.block_until_ready(out)
    expected_T = (T // HOP_LENGTH) * HOP_LENGTH
    assert out.shape == (B, 1, expected_T), out.shape
    assert out.dtype == jnp.float32
    assert bool(jnp.all(jnp.isfinite(out)))
    ref = _reference_forward(x)
    assert float(jnp.max(jnp.abs(out - ref))) < 1e-3
    # STFT->iSTFT with matching window/hop reconstructs the interior of x.
    assert float(jnp.max(jnp.abs(out[:, 0, :] - x[:, :expected_T]))) < 1e-3

    # 2) multi-tile grid with a masked partial last tile (T not a hop multiple).
    B2, T2 = 3, 2573
    x2 = jax.random.normal(k2, (B2, T2), dtype=jnp.float32)
    out2 = fwd(x2, max_tile_f=256)
    jax.block_until_ready(out2)
    assert out2.shape == (B2, 1, (T2 // HOP_LENGTH) * HOP_LENGTH), out2.shape
    assert bool(jnp.all(jnp.isfinite(out2)))
    ref2 = _reference_forward(x2)
    assert float(jnp.max(jnp.abs(out2 - ref2))) < 1e-3

    # 3) batch of 1: tile count is bumped so both v7x cores get work.
    B3, T3 = 1, 2560
    x3 = jax.random.normal(k3, (B3, T3), dtype=jnp.float32)
    out3 = fwd(x3)
    jax.block_until_ready(out3)
    assert out3.shape == (B3, 1, (T3 // HOP_LENGTH) * HOP_LENGTH), out3.shape
    ref3 = _reference_forward(x3)
    assert float(jnp.max(jnp.abs(out3 - ref3))) < 1e-3

    # 4) torch's exact magnitude/phase round trip (rsqrt identity in-kernel).
    out4 = fwd(x, exact_mag_phase=True)
    jax.block_until_ready(out4)
    ref4 = _reference_forward(x, exact_mag_phase=True)
    assert float(jnp.max(jnp.abs(out4 - ref4))) < 1e-3

    print("KERNEL_OK")
</pallas_src>

<mosaic_0001>
module attributes {stable_mosaic.version = 11 : i64} {
  func.func @_fused_kernel(%arg0: i32, %arg1: i32, %arg2: memref<1x1x5x136xf32, #tpu.memory_space<vmem>>, %arg3: memref<20x20xf32, #tpu.memory_space<vmem>>, %arg4: memref<11x20xf32, #tpu.memory_space<vmem>>, %arg5: memref<11x20xf32, #tpu.memory_space<vmem>>, %arg6: memref<20x11xf32, #tpu.memory_space<vmem>>, %arg7: memref<20x11xf32, #tpu.memory_space<vmem>>, %arg8: memref<4x5x1xf32, #tpu.memory_space<vmem>>, %arg9: memref<1x5x128xf32, #tpu.memory_space<vmem>>, %arg10: memref<20x131xf32, #tpu.memory_space<vmem>>, %arg11: memref<20x131xf32, #tpu.memory_space<vmem>>) attributes {dimension_semantics = [#tpu.dimension_semantics<parallel>, #tpu.dimension_semantics<parallel>], iteration_bounds = array<i64: 2, 1>, scalar_prefetch = 0 : i64, scratch_operands = 2 : i64, tpu.core_type = #tpu.core_type<tc>, window_params = [{transform_indices = @transform_0, window_bounds = array<i64: 1, 1, 5, 136>}, {pipeline_mode = #tpu.pipeline_mode<synchronous>, transform_indices = @transform_1, window_bounds = array<i64: 20, 20>}, {pipeline_mode = #tpu.pipeline_mode<synchronous>, transform_indices = @transform_2, window_bounds = array<i64: 11, 20>}, {pipeline_mode = #tpu.pipeline_mode<synchronous>, transform_indices = @transform_3, window_bounds = array<i64: 11, 20>}, {pipeline_mode = #tpu.pipeline_mode<synchronous>, transform_indices = @transform_4, window_bounds = array<i64: 20, 11>}, {pipeline_mode = #tpu.pipeline_mode<synchronous>, transform_indices = @transform_5, window_bounds = array<i64: 20, 11>}, {pipeline_mode = #tpu.pipeline_mode<synchronous>, transform_indices = @transform_6, window_bounds = array<i64: 4, 5, 1>}, {transform_indices = @transform_7, window_bounds = array<i64: 1, 5, 128>}]} {
    %c0 = arith.constant 0 : index
    %c0_0 = arith.constant 0 : index
    %c0_1 = arith.constant 0 : index
    %c0_2 = arith.constant 0 : index
    %0 = vector.load %arg2[%c0, %c0_0, %c0_1, %c0_2] : memref<1x1x5x136xf32, #tpu.memory_space<vmem>>, vector<1x1x5x136xf32>
    %1 = vector.shape_cast %0 : vector<1x1x5x136xf32> to vector<5x136xf32>
    %2 = vector.extract_strided_slice %1 {offsets = [0, 0], sizes = [5, 131], strides = [1, 1]} : vector<5x136xf32> to vector<5x131xf32>
    %c0_3 = arith.constant 0 : index
    %c0_4 = arith.constant 0 : index
    %3 = vector.load %arg10[%c0_3, %c0_4] : memref<20x131xf32, #tpu.memory_space<vmem>>, vector<5x131xf32>
    tpu.vector_store %arg10[%c0_3, %c0_4], %2 {strides = array<i32>} : memref<20x131xf32, #tpu.memory_space<vmem>>, vector<5x131xf32>,
    %4 = vector.extract_strided_slice %1 {offsets = [0, 1], sizes = [5, 131], strides = [1, 1]} : vector<5x136xf32> to vector<5x131xf32>
    %c5 = arith.constant 5 : index
    %c0_5 = arith.constant 0 : index
    %5 = vector.load %arg10[%c5, %c0_5] : memref<20x131xf32, #tpu.memory_space<vmem>>, vector<5x131xf32>
    tpu.vector_store %arg10[%c5, %c0_5], %4 {strides = array<i32>} : memref<20x131xf32, #tpu.memory_space<vmem>>, vector<5x131xf32>,
    %6 = vector.extract_strided_slice %1 {offsets = [0, 2], sizes = [5, 131], strides = [1, 1]} : vector<5x136xf32> to vector<5x131xf32>
    %c10 = arith.constant 10 : index
    %c0_6 = arith.constant 0 : index
    %7 = vector.load %arg10[%c10, %c0_6] : memref<20x131xf32, #tpu.memory_space<vmem>>, vector<5x131xf32>
    tpu.vector_store %arg10[%c10, %c0_6], %6 {strides = array<i32>} : memref<20x131xf32, #tpu.memory_space<vmem>>, vector<5x131xf32>,
    %8 = vector.extract_strided_slice %1 {offsets = [0, 3], sizes = [5, 131], strides = [1, 1]} : vector<5x136xf32> to vector<5x131xf32>
    %c15 = arith.constant 15 : index
    %c0_7 = arith.constant 0 : index
    %9 = vector.load %arg10[%c15, %c0_7] : memref<20x131xf32, #tpu.memory_space<vmem>>, vector<5x131xf32>
    tpu.vector_store %arg10[%c15, %c0_7], %8 {strides = array<i32>} : memref<20x131xf32, #tpu.memory_space<vmem>>, vector<5x131xf32>,
    %c0_8 = arith.constant 0 : index
    %c0_9 = arith.constant 0 : index
    %10 = vector.load %arg10[%c0_8, %c0_9] : memref<20x131xf32, #tpu.memory_space<vmem>>, vector<20x131xf32>
    %c0_10 = arith.constant 0 : index
    %c0_11 = arith.constant 0 : index
    %11 = vector.load %arg3[%c0_10, %c0_11] : memref<20x20xf32, #tpu.memory_space<vmem>>, vector<20x20xf32>
    %cst = arith.constant dense<0.000000e+00> : vector<20x131xf32>
    %12 = tpu.matmul %11, %10, %cst {dimension_numbers = #tpu.dot_dimension_numbers<[1], [0], [0], [1], [0, 0, 1, 1], [], []>} : vector<20x20xf32>, vector<20x131xf32>, vector<20x131xf32> -> vector<20x131xf32>
    %c0_12 = arith.constant 0 : index
    %c0_13 = arith.constant 0 : index
    %13 = vector.load %arg11[%c0_12, %c0_13] : memref<20x131xf32, #tpu.memory_space<vmem>>, vector<20x131xf32>
    tpu.vector_store %arg11[%c0_12, %c0_13], %12 {strides = array<i32>} : memref<20x131xf32, #tpu.memory_space<vmem>>, vector<20x131xf32>,
    %c128_i32 = arith.constant 128 : i32
    %14 = arith.muli %arg1, %c128_i32 : i32
    %15 = tpu.iota {dimensions = array<i32: 1>} : vector<1x128xi32>
    %16 = vector.broadcast %14 : i32 to vector<1x128xi32>
    %17 = arith.addi %16, %15 : vector<1x128xi32>
    %cst_14 = arith.constant 0.000000e+00 : f32
    %18 = vector.broadcast %cst_14 : f32 to vector<5x128xf32>
    %cst_15 = arith.constant 0.000000e+00 : f32
    %19 = vector.broadcast %cst_15 : f32 to vector<5x128xf32>
    %c2_i32 = arith.constant 2 : i32
    %20 = vector.broadcast %c2_i32 : i32 to vector<1x128xi32>
    %21 = arith.addi %17, %20 : vector<1x128xi32>
    %c0_i32 = arith.constant 0 : i32
    %22 = vector.broadcast %c0_i32 : i32 to vector<1x128xi32>
    %23 = arith.cmpi sge, %21, %22 : vector<1x128xi32>
    %c32_i32 = arith.constant 32 : i32
    %24 = vector.broadcast %c32_i32 : i32 to vector<1x128xi32>
    %25 = arith.cmpi sle, %21, %24 : vector<1x128xi32>
    %26 = arith.andi %23, %25 : vector<1x128xi1>
    %27 = arith.extui %26 : vector<1x128xi1> to vector<1x128xi32>
    %28 = arith.sitofp %27 : vector<1x128xi32> to vector<1x128xf32>
    %c0_16 = arith.constant 0 : index
    %c3 = arith.constant 3 : index
    %29 = vector.load %arg11[%c0_16, %c3] : memref<20x131xf32, #tpu.memory_space<vmem>>, vector<5x128xf32>
    %30 = vector.broadcast %28 : vector<1x128xf32> to vector<5x128xf32>
    %31 = arith.mulf %30, %29 : vector<5x128xf32>
    %32 = arith.addf %18, %31 : vector<5x128xf32>
    %c0_17 = arith.constant 0 : index
    %c0_18 = arith.constant 0 : index
    %c0_19 = arith.constant 0 : index
    %33 = vector.load %arg8[%c0_17, %c0_18, %c0_19] : memref<4x5x1xf32, #tpu.memory_space<vmem>>, vector<1x5x1xf32>
    %34 = vector.shape_cast %33 : vector<1x5x1xf32> to vector<5x1xf32>
    %35 = vector.broadcast %28 : vector<1x128xf32> to vector<5x128xf32>
    %36 = vector.broadcast %34 : vector<5x1xf32> to vector<5x128xf32>
    %37 = arith.mulf %35, %36 : vector<5x128xf32>
    %38 = arith.addf %19, %37 : vector<5x128xf32>
    %c1_i32 = arith.constant 1 : i32
    %39 = vector.broadcast %c1_i32 : i32 to vector<1x128xi32>
    %40 = arith.addi %17, %39 : vector<1x128xi32>
    %c0_i32_20 = arith.constant 0 : i32
    %41 = vector.broadcast %c0_i32_20 : i32 to vector<1x128xi32>
    %42 = arith.cmpi sge, %40, %41 : vector<1x128xi32>
    %c32_i32_21 = arith.constant 32 : i32
    %43 = vector.broadcast %c32_i32_21 : i32 to vector<1x128xi32>
    %44 = arith.cmpi sle, %40, %43 : vector<1x128xi32>
    %45 = arith.andi %42, %44 : vector<1x128xi1>
    %46 = arith.extui %45 : vector<1x128xi1> to vector<1x128xi32>
    %47 = arith.sitofp %46 : vector<1x128xi32> to vector<1x128xf32>
    %c5_22 = arith.constant 5 : index
    %c2 = arith.constant 2 : index
    %48 = vector.load %arg11[%c5_22, %c2] : memref<20x131xf32, #tpu.memory_space<vmem>>, vector<5x128xf32>
    %49 = vector.broadcast %47 : vector<1x128xf32> to vector<5x128xf32>
    %50 = arith.mulf %49, %48 : vector<5x128xf32>
    %51 = arith.addf %32, %50 : vector<5x128xf32>
    %c1 = arith.constant 1 : index
    %c0_23 = arith.constant 0 : index
    %c0_24 = arith.constant 0 : index
    %52 = vector.load %arg8[%c1, %c0_23, %c0_24] : memref<4x5x1xf32, #tpu.memory_space<vmem>>, vector<1x5x1xf32>
    %53 = vector.shape_cast %52 : vector<1x5x1xf32> to vector<5x1xf32>
    %54 = vector.broadcast %47 : vector<1x128xf32> to vector<5x128xf32>
    %55 = vector.broadcast %53 : vector<5x1xf32> to vector<5x128xf32>
    %56 = arith.mulf %54, %55 : vector<5x128xf32>
    %57 = arith.addf %38, %56 : vector<5x128xf32>
    %c0_i32_25 = arith.constant 0 : i32
    %58 = vector.broadcast %c0_i32_25 : i32 to vector<1x128xi32>
    %59 = arith.addi %17, %58 : vector<1x128xi32>
    %c0_i32_26 = arith.constant 0 : i32
    %60 = vector.broadcast %c0_i32_26 : i32 to vector<1x128xi32>
    %61 = arith.cmpi sge, %59, %60 : vector<1x128xi32>
    %c32_i32_27 = arith.constant 32 : i32
    %62 = vector.broadcast %c32_i32_27 : i32 to vector<1x128xi32>
    %63 = arith.cmpi sle, %59, %62 : vector<1x128xi32>
    %64 = arith.andi %61, %63 : vector<1x128xi1>
    %65 = arith.extui %64 : vector<1x128xi1> to vector<1x128xi32>
    %66 = arith.sitofp %65 : vector<1x128xi32> to vector<1x128xf32>
    %c10_28 = arith.constant 10 : index
    %c1_29 = arith.constant 1 : index
    %67 = vector.load %arg11[%c10_28, %c1_29] : memref<20x131xf32, #tpu.memory_space<vmem>>, vector<5x128xf32>
    %68 = vector.broadcast %66 : vector<1x128xf32> to vector<5x128xf32>
    %69 = arith.mulf %68, %67 : vector<5x128xf32>
    %70 = arith.addf %51, %69 : vector<5x128xf32>
    %c2_30 = arith.constant 2 : index
    %c0_31 = arith.constant 0 : index
    %c0_32 = arith.constant 0 : index
    %71 = vector.load %arg8[%c2_30, %c0_31, %c0_32] : memref<4x5x1xf32, #tpu.memory_space<vmem>>, vector<1x5x1xf32>
    %72 = vector.shape_cast %71 : vector<1x5x1xf32> to vector<5x1xf32>
    %73 = vector.broadcast %66 : vector<1x128xf32> to vector<5x128xf32>
    %74 = vector.broadcast %72 : vector<5x1xf32> to vector<5x128xf32>
    %75 = arith.mulf %73, %74 : vector<5x128xf32>
    %76 = arith.addf %57, %75 : vector<5x128xf32>
    %c-1_i32 = arith.constant -1 : i32
    %77 = vector.broadcast %c-1_i32 : i32 to vector<1x128xi32>
    %78 = arith.addi %17, %77 : vector<1x128xi32>
    %c0_i32_33 = arith.constant 0 : i32
    %79 = vector.broadcast %c0_i32_33 : i32 to vector<1x128xi32>
    %80 = arith.cmpi sge, %78, %79 : vector<1x128xi32>
    %c32_i32_34 = arith.constant 32 : i32
    %81 = vector.broadcast %c32_i32_34 : i32 to vector<1x128xi32>
    %82 = arith.cmpi sle, %78, %81 : vector<1x128xi32>
    %83 = arith.andi %80, %82 : vector<1x128xi1>
    %84 = arith.extui %83 : vector<1x128xi1> to vector<1x128xi32>
    %85 = arith.sitofp %84 : vector<1x128xi32> to vector<1x128xf32>
    %c15_35 = arith.constant 15 : index
    %c0_36 = arith.constant 0 : index
    %86 = vector.load %arg11[%c15_35, %c0_36] : memref<20x131xf32, #tpu.memory_space<vmem>>, vector<5x128xf32>
    %87 = vector.broadcast %85 : vector<1x128xf32> to vector<5x128xf32>
    %88 = arith.mulf %87, %86 : vector<5x128xf32>
    %89 = arith.addf %70, %88 : vector<5x128xf32>
    %c3_37 = arith.constant 3 : index
    %c0_38 = arith.constant 0 : index
    %c0_39 = arith.constant 0 : index
    %90 = vector.load %arg8[%c3_37, %c0_38, %c0_39] : memref<4x5x1xf32, #tpu.memory_space<vmem>>, vector<1x5x1xf32>
    %91 = vector.shape_cast %90 : vector<1x5x1xf32> to vector<5x1xf32>
    %92 = vector.broadcast %85 : vector<1x128xf32> to vector<5x128xf32>
    %93 = vector.broadcast %91 : vector<5x1xf32> to vector<5x128xf32>
    %94 = arith.mulf %92, %93 : vector<5x128xf32>
    %95 = arith.addf %76, %94 : vector<5x128xf32>
    %cst_40 = arith.constant 9.99999993E-9 : f32
    %96 = vector.broadcast %cst_40 : f32 to vector<5x128xf32>
    %97 = arith.cmpf ogt, %95, %96 : vector<5x128xf32>
    %cst_41 = arith.constant 1.000000e+00 : f32
    %98 = vector.broadcast %cst_41 : f32 to vector<5x128xf32>
    %99 = arith.divf %98, %95 : vector<5x128xf32>
    %cst_42 = arith.constant 0.000000e+00 : f32
    %100 = vector.broadcast %cst_42 : f32 to vector<5x128xf32>
    %101 = arith.select %97, %99, %100 : vector<5x128xi1>, vector<5x128xf32>
    %102 = arith.mulf %89, %101 : vector<5x128xf32>
    %c0_43 = arith.constant 0 : index
    %c0_44 = arith.constant 0 : index
    %c0_45 = arith.constant 0 : index
    %103 = vector.load %arg9[%c0_43, %c0_44, %c0_45] : memref<1x5x128xf32, #tpu.memory_space<vmem>>, vector<1x5x128xf32>
    %104 = vector.shape_cast %103 : vector<1x5x128xf32> to vector<5x128xf32>
    %105 = vector.shape_cast %102 : vector<5x128xf32> to vector<1x5x128xf32>
    tpu.vector_store %arg9[%c0_43, %c0_44, %c0_45], %105 {strides = array<i32>} : memref<1x5x128xf32, #tpu.memory_space<vmem>>, vector<1x5x128xf32>,
    return
  }
  func.func @transform_0(%arg0: i32, %arg1: i32) -> (i32, i32, i32, i32) {
    %c0_i32 = arith.constant 0 : i32
    %c0_i32_0 = arith.constant 0 : i32
    %c0_i32_1 = arith.constant 0 : i32
    return %arg0, %arg1, %c0_i32, %c0_i32_0 : i32, i32, i32, i32
  }
  func.func @transform_1(%arg0: i32, %arg1: i32) -> (i32, i32) {
    %c0_i32 = arith.constant 0 : i32
    %c0_i32_0 = arith.constant 0 : i32
    %c0_i32_1 = arith.constant 0 : i32
    return %c0_i32, %c0_i32_0 : i32, i32
  }
  func.func @transform_2(%arg0: i32, %arg1: i32) -> (i32, i32) {
    %c0_i32 = arith.constant 0 : i32
    %c0_i32_0 = arith.constant 0 : i32
    %c0_i32_1 = arith.constant 0 : i32
    return %c0_i32, %c0_i32_0 : i32, i32
  }
  func.func @transform_3(%arg0: i32, %arg1: i32) -> (i32, i32) {
    %c0_i32 = arith.constant 0 : i32
    %c0_i32_0 = arith.constant 0 : i32
    %c0_i32_1 = arith.constant 0 : i32
    return %c0_i32, %c0_i32_0 : i32, i32
  }
  func.func @transform_4(%arg0: i32, %arg1: i32) -> (i32, i32) {
    %c0_i32 = arith.constant 0 : i32
    %c0_i32_0 = arith.constant 0 : i32
    %c0_i32_1 = arith.constant 0 : i32
    return %c0_i32, %c0_i32_0 : i32, i32
  }
  func.func @transform_5(%arg0: i32, %arg1: i32) -> (i32, i32) {
    %c0_i32 = arith.constant 0 : i32
    %c0_i32_0 = arith.constant 0 : i32
    %c0_i32_1 = arith.constant 0 : i32
    return %c0_i32, %c0_i32_0 : i32, i32
  }
  func.func @transform_6(%arg0: i32, %arg1: i32) -> (i32, i32, i32) {
    %c0_i32 = arith.constant 0 : i32
    %c0_i32_0 = arith.constant 0 : i32
    %c0_i32_1 = arith.constant 0 : i32
    %c0_i32_2 = arith.constant 0 : i32
    return %c0_i32, %c0_i32_0, %c0_i32_1 : i32, i32, i32
  }
  func.func @transform_7(%arg0: i32, %arg1: i32) -> (i32, i32, i32) {
    %c0_i32 = arith.constant 0 : i32
    %c0_i32_0 = arith.constant 0 : i32
    return %arg0, %c0_i32, %arg1 : i32, i32, i32
  }
}

</mosaic_0001>

<llo_original>
// kernel: torch_stft2d_forward.1
$region0: #{torch_stft2d_forward.1}
  #allocation0 [shape = 'u32[]', space=smem, size = 0x4, offset = 0x4, fixed_abs, tag = 'smem constant byte address 0x4 - core index']
  #allocation1 [shape = 'u32[72,128]{1,0:T(1,128)}', space=vmem, size = 0x9000, scoped, tag = 'internal scratch']
  #allocation2 [shape = 'f32[20,131]{1,0:T(8,128)}', space=vmem, size = 0x6000, scoped, tag = 'scratch operand']
  #allocation3 [shape = 'f32[20,131]{1,0:T(8,128)}', space=vmem, size = 0x6000, scoped, tag = 'scratch operand']
  %s0 = inlined_call_operand.vmem [shape: f32[2,1,5,136], index: 0, kind: input, shape index: {}]
  %s1 = inlined_call_operand.vmem [shape: f32[20,20], index: 1, kind: input, shape index: {}]
  %s2 = inlined_call_operand.vmem [shape: f32[11,20], index: 2, kind: input, shape index: {}]
  %s3 = inlined_call_operand.vmem [shape: f32[11,20], index: 3, kind: input, shape index: {}]
  %s4 = inlined_call_operand.vmem [shape: f32[20,11], index: 4, kind: input, shape index: {}]
  %s5 = inlined_call_operand.vmem [shape: f32[20,11], index: 5, kind: input, shape index: {}]
  %s6 = inlined_call_operand.vmem [shape: f32[4,5,1], index: 6, kind: input, shape index: {}]
  %s7 = inlined_call_operand.vmem [shape: f32[2,5,128], index: 7, kind: output, shape index: {}]
  %s8 = sld [smem:[#allocation0]]
  $region61: #{torch_stft2d_forward.1} parent=0
    _
  %s10 = ssub.s32 1, %s8
  %s11 = scalar_select 0, %s10, %s8
  loop: start=0, step=1, limit=4
  $region2: #{torch_stft2d_forward.1} parent=0 // loop_pre_header
    _
  $region3: #{torch_stft2d_forward.1} parent=0 // loop_header
    %s13 = sphi 0, %s17
    %p14 = scmp.ge.s32.totalorder %s13, 4
    %s20 = sphi 0, %s32
    %s21 = sphi 0, %s28
    %s22 = sphi 0, %s20
    %s23 = sphi 0, %s21
    %s24 = sphi 0, %s22
    %s25 = sphi 0, %s23
    %s37 = sphi 0, %s39
    %s40 = sphi 0, %s37
    %s41 = sphi 0, %s40
    %s57 = sphi 0, %s41
    %s61 = sphi 0, %s61
    %s63 = sphi 0, %s61
    %s64 = sphi 0, %s63
    %s78 = sphi 0, %s64
    %s82 = sphi 0, %s82
    %s84 = sphi 0, %s82
    %s85 = sphi 0, %s84
    %s99 = sphi 0, %s85
    %s103 = sphi 0, %s103
    %s105 = sphi 0, %s103
    %s106 = sphi 0, %s105
    %s120 = sphi 0, %s106
    %s124 = sphi 0, %s124
    %s126 = sphi 0, %s124
    %s127 = sphi 0, %s126
    %s141 = sphi 0, %s127
    %s145 = sphi 0, %s145
    %s147 = sphi 0, %s145
    %s148 = sphi 0, %s147
    %s162 = sphi 0, %s148
    %s166 = sphi 0, %s166
    %s168 = sphi 0, %s166
    %s169 = sphi 0, %s168
    %s183 = sphi 0, %s169
    %s191 = sphi 0, %s193
    %s194 = sphi 0, %s191
    %s195 = sphi 0, %s194
    %s211 = sphi 0, %s195
  $region4: #{torch_stft2d_forward.1} parent=0 // loop_header_branch
    %16 = sbr.rel (%p14) target = $region8
  $region5: #{torch_stft2d_forward.1} parent=0 // loop_body
    %s18 = ssub.s32 %s13, 1
    %s19 = ssub.s32 %s13, 2
    %s26 = sadd.s32 1, %s21
    %p27 = scmp.ge.s32.totalorder %s26, 1
    %s28 = scalar_select %p27, 0, %s26
    %s29 = sadd.s32 1, %s20
    %s30 = scalar_select %p27, %s29, %s20
    %p31 = scmp.ge.s32.totalorder %s30, 2
    %s32 = scalar_select %p31, 0, %s30
    %s33 = ssub.s32 %s20, %s32
    %s34 = ssub.s32 %s21, %s28
    %s35 = sor.u32 %s33, %s34
    %p36 = scmp.eq.s32.totalorder %s35, 0
    %s38 = sadd.s32 %s37, 1
    %s39 = scalar_select %p36, %s37, %s38
    %p42 = pneg %p36
    %p43 = scmp.eq.s32.totalorder %s13, 1
    %p44 = por %p42, %p43
    %p45 = scmp.ne.s32.totalorder %s37, %s40
    %p46 = scmp.eq.s32.totalorder %s13, 0
    %p47 = por %p45, %p46
    %p48 = scmp.ne.s32.totalorder %s37, %s40
    %p49 = scmp.eq.s32.totalorder %s18, 1
    %p50 = por %p48, %p49
    %p51 = scmp.ne.s32.totalorder %s40, %s41
    %p52 = scmp.eq.s32.totalorder %s18, 0
    %p53 = por %p51, %p52
    %p54 = scmp.ne.s32.totalorder %s40, %s41
    %p55 = scmp.eq.s32.totalorder %s19, 1
    %p56 = por %p54, %p55
    %p58 = scmp.ne.s32.totalorder %s41, %s57
    %p59 = scmp.eq.s32.totalorder %s19, 0
    %p60 = por %p58, %p59
    %s62 = sadd.s32 %s61, 1
    %p65 = scmp.eq.s32.totalorder %s13, 1
    %p66 = scmp.ne.s32.totalorder %s61, %s63
    %p67 = scmp.eq.s32.totalorder %s13, 0
    %p68 = por %p66, %p67
    %p69 = scmp.ne.s32.totalorder %s61, %s63
    %p70 = scmp.eq.s32.totalorder %s18, 1
    %p71 = por %p69, %p70
    %p72 = scmp.ne.s32.totalorder %s63, %s64
    %p73 = scmp.eq.s32.totalorder %s18, 0
    %p74 = por %p72, %p73
    %p75 = scmp.ne.s32.totalorder %s63, %s64
    %p76 = scmp.eq.s32.totalorder %s19, 1
    %p77 = por %p75, %p76
    %p79 = scmp.ne.s32.totalorder %s64, %s78
    %p80 = scmp.eq.s32.totalorder %s19, 0
    %p81 = por %p79, %p80
    %s83 = sadd.s32 %s82, 1
    %p86 = scmp.eq.s32.totalorder %s13, 1
    %p87 = scmp.ne.s32.totalorder %s82, %s84
    %p88 = scmp.eq.s32.totalorder %s13, 0
    %p89 = por %p87, %p88
    %p90 = scmp.ne.s32.totalorder %s82, %s84
    %p91 = scmp.eq.s32.totalorder %s18, 1
    %p92 = por %p90, %p91
    %p93 = scmp.ne.s32.totalorder %s84, %s85
    %p94 = scmp.eq.s32.totalorder %s18, 0
    %p95 = por %p93, %p94
    %p96 = scmp.ne.s32.totalorder %s84, %s85
    %p97 = scmp.eq.s32.totalorder %s19, 1
    %p98 = por %p96, %p97
    %p100 = scmp.ne.s32.totalorder %s85, %s99
    %p101 = scmp.eq.s32.totalorder %s19, 0
    %p102 = por %p100, %p101
    %s104 = sadd.s32 %s103, 1
    %p107 = scmp.eq.s32.totalorder %s13, 1
    %p108 = scmp.ne.s32.totalorder %s103, %s105
    %p109 = scmp.eq.s32.totalorder %s13, 0
    %p110 = por %p108, %p109
    %p111 = scmp.ne.s32.totalorder %s103, %s105
    %p112 = scmp.eq.s32.totalorder %s18, 1
    %p113 = por %p111, %p112
    %p114 = scmp.ne.s32.totalorder %s105, %s106
    %p115 = scmp.eq.s32.totalorder %s18, 0
    %p116 = por %p114, %p115
    %p117 = scmp.ne.s32.totalorder %s105, %s106
    %p118 = scmp.eq.s32.totalorder %s19, 1
    %p119 = por %p117, %p118
    %p121 = scmp.ne.s32.totalorder %s106, %s120
    %p122 = scmp.eq.s32.totalorder %s19, 0
    %p123 = por %p121, %p122
    %s125 = sadd.s32 %s124, 1
    %p128 = scmp.eq.s32.totalorder %s13, 1
    %p129 = scmp.ne.s32.totalorder %s124, %s126
    %p130 = scmp.eq.s32.totalorder %s13, 0
    %p131 = por %p129, %p130
    %p132 = scmp.ne.s32.totalorder %s124, %s126
    %p133 = scmp.eq.s32.totalorder %s18, 1
    %p134 = por %p132, %p133
    %p135 = scmp.ne.s32.totalorder %s126, %s127
    %p136 = scmp.eq.s32.totalorder %s18, 0
    %p137 = por %p135, %p136
    %p138 = scmp.ne.s32.totalorder %s126, %s127
    %p139 = scmp.eq.s32.totalorder %s19, 1
    %p140 = por %p138, %p139
    %p142 = scmp.ne.s32.totalorder %s127, %s141
    %p143 = scmp.eq.s32.totalorder %s19, 0
    %p144 = por %p142, %p143
    %s146 = sadd.s32 %s145, 1
    %p149 = scmp.eq.s32.totalorder %s13, 1
    %p150 = scmp.ne.s32.totalorder %s145, %s147
    %p151 = scmp.eq.s32.totalorder %s13, 0
    %p152 = por %p150, %p151
    %p153 = scmp.ne.s32.totalorder %s145, %s147
    %p154 = scmp.eq.s32.totalorder %s18, 1
    %p155 = por %p153, %p154
    %p156 = scmp.ne.s32.totalorder %s147, %s148
    %p157 = scmp.eq.s32.totalorder %s18, 0
    %p158 = por %p156, %p157
    %p159 = scmp.ne.s32.totalorder %s147, %s148
    %p160 = scmp.eq.s32.totalorder %s19, 1
    %p161 = por %p159, %p160
    %p163 = scmp.ne.s32.totalorder %s148, %s162
    %p164 = scmp.eq.s32.totalorder %s19, 0
    %p165 = por %p163, %p164
    %s167 = sadd.s32 %s166, 1
    %p170 = scmp.eq.s32.totalorder %s13, 1
    %p171 = scmp.ne.s32.totalorder %s166, %s168
    %p172 = scmp.eq.s32.totalorder %s13, 0
    %p173 = por %p171, %p172
    %p174 = scmp.ne.s32.totalorder %s166, %s168
    %p175 = scmp.eq.s32.totalorder %s18, 1
    %p176 = por %p174, %p175
    %p177 = scmp.ne.s32.totalorder %s168, %s169
    %p178 = scmp.eq.s32.totalorder %s18, 0
    %p179 = por %p177, %p178
    %p180 = scmp.ne.s32.totalorder %s168, %s169
    %p181 = scmp.eq.s32.totalorder %s19, 1
    %p182 = por %p180, %p181
    %p184 = scmp.ne.s32.totalorder %s169, %s183
    %p185 = scmp.eq.s32.totalorder %s19, 0
    %p186 = por %p184, %p185
    %s187 = ssub.s32 %s20, %s32
    %s188 = ssub.s32 %s21, %s28
    %s189 = sor.u32 %s187, %s188
    %p190 = scmp.eq.s32.totalorder %s189, 0
    %s192 = sadd.s32 %s191, 1
    %s193 = scalar_select %p190, %s191, %s192
    %p196 = pneg %p190
    %p197 = scmp.eq.s32.totalorder %s13, 1
    %p198 = por %p196, %p197
    %p199 = scmp.ne.s32.totalorder %s191, %s194
    %p200 = scmp.eq.s32.totalorder %s13, 0
    %p201 = por %p199, %p200
    %p202 = scmp.ne.s32.totalorder %s191, %s194
    %p203 = scmp.eq.s32.totalorder %s18, 1
    %p204 = por %p202, %p203
    %p205 = scmp.ne.s32.totalorder %s194, %s195
    %p206 = scmp.eq.s32.totalorder %s18, 0
    %p207 = por %p205, %p206
    %p208 = scmp.ne.s32.totalorder %s194, %s195
    %p209 = scmp.eq.s32.totalorder %s19, 1
    %p210 = por %p208, %p209
    %p212 = scmp.ne.s32.totalorder %s195, %s211
    %p213 = scmp.eq.s32.totalorder %s19, 0
    %p214 = por %p212, %p213
    %p215 = scmp.le.s32.totalorder 1, %s13
    %p216 = scmp.lt.s32.totalorder %s13, 3
    %p217 = pnand %p215, %p216
    %p218 = pneg %p217
    // Predicated region
    $region9: #{torch_stft2d_forward.1} parent=5 // pred_check
      _
    $region10: #{torch_stft2d_forward.1} parent=5 // pred_check_branch
      %220 = sbr.rel (%p217) target = $region12
    $region11: #{torch_stft2d_forward.1} parent=5 // pred_region
      %s221 = ssub.s32 %s13, 1
      // Predicated region
      $region13: #{torch_stft2d_forward.1} parent=11 // pred_check
        %p222 = pneg %p74
      $region14: #{torch_stft2d_forward.1} parent=11 // pred_check_branch
        %224 = sbr.rel (%p222) target = $region16
      $region15: #{torch_stft2d_forward.1} parent=11 // pred_region
        _
      $region16: #{torch_stft2d_forward.1} parent=11 // pred_fallthru
        _
      // Predicated region
      $region17: #{torch_stft2d_forward.1} parent=11 // pred_check
        %p225 = pneg %p95
      $region18: #{torch_stft2d_forward.1} parent=11 // pred_check_branch
        %227 = sbr.rel (%p225) target = $region20
      $region19: #{torch_stft2d_forward.1} parent=11 // pred_region
        _
      $region20: #{torch_stft2d_forward.1} parent=11 // pred_fallthru
        _
      // Predicated region
      $region21: #{torch_stft2d_forward.1} parent=11 // pred_check
        %p228 = pneg %p116
      $region22: #{torch_stft2d_forward.1} parent=11 // pred_check_branch
        %230 = sbr.rel (%p228) target = $region24
      $region23: #{torch_stft2d_forward.1} parent=11 // pred_region
        _
      $region24: #{torch_stft2d_forward.1} parent=11 // pred_fallthru
        _
      // Predicated region
      $region25: #{torch_stft2d_forward.1} parent=11 // pred_check
        %p231 = pneg %p137
      $region26: #{torch_stft2d_forward.1} parent=11 // pred_check_branch
        %233 = sbr.rel (%p231) target = $region28
      $region27: #{torch_stft2d_forward.1} parent=11 // pred_region
        _
      $region28: #{torch_stft2d_forward.1} parent=11 // pred_fallthru
        _
      // Predicated region
      $region29: #{torch_stft2d_forward.1} parent=11 // pred_check
        %p234 = pneg %p158
      $region30: #{torch_stft2d_forward.1} parent=11 // pred_check_branch
        %236 = sbr.rel (%p234) target = $region32
      $region31: #{torch_stft2d_forward.1} parent=11 // pred_region
        _
      $region32: #{torch_stft2d_forward.1} parent=11 // pred_fallthru
        _
      // Predicated region
      $region33: #{torch_stft2d_forward.1} parent=11 // pred_check
        %p237 = pneg %p179
      $region34: #{torch_stft2d_forward.1} parent=11 // pred_check_branch
        %239 = sbr.rel (%p237) target = $region36
      $region35: #{torch_stft2d_forward.1} parent=11 // pred_region
        _
      $region36: #{torch_stft2d_forward.1} parent=11 // pred_fallthru
        _
    $region12: #{torch_stft2d_forward.1} parent=5 // pred_fallthru
      _
    %p240 = scmp.lt.s32.totalorder %s13, 2
    // Predicated region
    $region37: #{torch_stft2d_forward.1} parent=5 // pred_check
      %p241 = pneg %p240
    $region38: #{torch_stft2d_forward.1} parent=5 // pred_check_branch
      %243 = sbr.rel (%p241) target = $region40
    $region39: #{torch_stft2d_forward.1} parent=5 // pred_region
      // Predicated region
      $region41: #{torch_stft2d_forward.1} parent=39 // pred_check
        %p244 = pneg %p47
      $region42: #{torch_stft2d_forward.1} parent=39 // pred_check_branch
        %246 = sbr.rel (%p244) target = $region44
      $region43: #{torch_stft2d_forward.1} parent=39 // pred_region
        %p247 = scmp.lt.s32.totalorder %s20, 1
        %s248 = scalar_select %p247, %s20, 1
        %p249 = scmp.lt.s32.totalorder %s21, 0
        %s250 = scalar_select %p249, %s21, 0
        %s251 = smul.addr %s250, 2
        %s252 = smul.addr %s248, 2
        %s253 = sadd.s32 %s251, %s252
        %s254 = smul.addr %s253, 8
        %s255 = scalar_lea.vmem %s0, %s254
      $region44: #{torch_stft2d_forward.1} parent=39 // pred_fallthru
        _
    $region40: #{torch_stft2d_forward.1} parent=5 // pred_fallthru
      _
    %p256 = scmp.le.s32.totalorder 1, %s13
    %p257 = scmp.lt.s32.totalorder %s13, 3
    %p258 = pnand %p256, %p257
    %p259 = pneg %p258
    // Predicated region
    $region45: #{torch_stft2d_forward.1} parent=5 // pred_check
      _
    $region46: #{torch_stft2d_forward.1} parent=5 // pred_check_branch
      %261 = sbr.rel (%p258) target = $region48
    $region47: #{torch_stft2d_forward.1} parent=5 // pred_region
      %s262 = ssub.s32 %s13, 1
      %p263 = scmp.lt.s32.totalorder %s22, 1
      %s264 = scalar_select %p263, %s22, 1
      %p265 = scmp.lt.s32.totalorder %s23, 0
      %s266 = scalar_select %p265, %s23, 0
      %s267 = smul.addr %s266, 2
      %s268 = smul.addr %s264, 2
      %s269 = sadd.s32 %s267, %s268
      %s270 = smul.addr %s269, 8
      %s271 = scalar_lea.vmem %s0, %s270
      %p272 = pneg %p53
      %p273 = pneg %p50
      %p274 = pneg %p74
      %p275 = pneg %p71
      %p276 = pneg %p95
      %p277 = pneg %p92
      %p278 = pneg %p116
      %p279 = pneg %p113
      %p280 = pneg %p137
      %p281 = pneg %p134
      %p282 = pneg %p158
      %p283 = pneg %p155
      %p284 = pneg %p179
      %p285 = pneg %p176
      %p286 = pneg %p207
      %p287 = pneg %p204
      %p288 = scmp.lt.s32.totalorder %s22, 1
      %s289 = scalar_select %p288, %s22, 1
      %p290 = scmp.lt.s32.totalorder %s23, 0
      %s291 = scalar_select %p290, %s23, 0
      %s292 = sadd.s32 %s291, %s289
      %s293 = smul.addr %s292, 8
      %s294 = scalar_lea.vmem %s7, %s293
      %p295 = scmp.lt.s32.totalorder %s22, 1
      %s296 = scalar_select %p295, %s22, 1
      %p297 = scmp.lt.s32.totalorder %s23, 0
      %s298 = scalar_select %p297, %s23, 0
      %s299 = smul.addr %s298, 2
      %s300 = smul.addr %s296, 2
      %s301 = sadd.s32 %s299, %s300
      %s302 = smul.addr %s301, 8
      %s303 = scalar_lea.vmem %s0, %s302
      %p304 = scmp.lt.s32.totalorder %s22, 1
      %s305 = scalar_select %p304, %s22, 1
      %p306 = scmp.lt.s32.totalorder %s23, 0
      %s307 = scalar_select %p306, %s23, 0
      %s308 = sadd.s32 %s307, %s305
      %s309 = smul.addr %s308, 8
      %s310 = scalar_lea.vmem %s7, %s309
      %v311 = vld [vmem:[%s303] sm:$0x1f]
      %v312 = vld [vmem:[%s303 + $0x8] sm:$0x1f]
      %313 = vst [vmem:[#allocation2] sm:$0x1f] %v311
      %vm314 = vcmask 20480
      %315 = vst.msk [vmem:[#allocation2 + $0x8] sm:$0x1f] %vm314, %v312
      %v318 = vrot.slane %v311, 3
      %v319 = vrot.slane %v312, 3
      %320 = vrot.lane.b32.xlu0 %v318, 127
      %v321 = vpop.permute.xlu0 %320
      %322 = vrot.lane.b32.xlu0 %v319, 127
      %v323 = vpop.permute.xlu0 %322
      %vm324 = vcmask 1039360
      %v325 = vsel %vm324, %v321, %v323
      %328 = vst [vmem:[#allocation2] sm:$0xe0] %v325
      %vm329 = vcmask 23557
      %330 = vst.msk [vmem:[#allocation2 + $0x8] sm:$0xe0] %vm329, %v323
      %331 = vst [vmem:[#allocation2 + $0x10] sm:$0x3] %v325
      %vm332 = vcmask 17408
      %333 = vst.msk [vmem:[#allocation2 + $0x18] sm:$0x3] %vm332, %v323
      %v334 = vrot.slane %v311, 6
      %v335 = vrot.slane %v312, 6
      %336 = vrot.lane.b32.xlu0 %v334, 126
      %v337 = vpop.permute.xlu0 %336
      %338 = vrot.lane.b32.xlu0 %v335, 126
      %v339 = vpop.permute.xlu0 %338
      %vm340 = vcmask 1031168
      %v341 = vsel %vm340, %v337, %v339
      %344 = vst [vmem:[#allocation2 + $0x10] sm:$0x7c] %v341
      %vm345 = vcmask 22530
      %346 = vst.msk [vmem:[#allocation2 + $0x18] sm:$0x7c] %vm345, %v339
      %v347 = vrot.slane %v311, 1
      %v348 = vrot.slane %v312, 1
      %349 = vrot.lane.b32.xlu0 %v347, 125
      %v350 = vpop.permute.xlu0 %349
      %351 = vrot.lane.b32.xlu0 %v348, 125
      %v352 = vpop.permute.xlu0 %351
      %vm353 = vcmask 1022976
      %v354 = vsel %vm353, %v350, %v352
      %357 = vst [vmem:[#allocation2 + $0x10] sm:$0x80] %v354
      %vm358 = vcmask 23559
      %359 = vst.msk [vmem:[#allocation2 + $0x18] sm:$0x80] %vm358, %v352
      %360 = vst [vmem:[#allocation2 + $0x20] sm:$0xf] %v354
      %vm361 = vcmask 19456
      %362 = vst.msk [vmem:[#allocation2 + $0x28] sm:$0xf] %vm361, %v352
      %v363 = vld [vmem:[#allocation2] sm:$0xff]
      %v364 = vld [vmem:[#allocation2 + $0x8] sm:$0xff]
      %v365 = vld [vmem:[#allocation2 + $0x10] sm:$0xff]
      %v366 = vld [vmem:[#allocation2 + $0x18] sm:$0xff]
      %v367 = vld [vmem:[#allocation2 + $0x20] sm:$0xf]
      %v368 = vld [vmem:[#allocation2 + $0x28] sm:$0xf]
      %v369 = vld [vmem:[%s1] sm:$0xff]
      %v370 = vld [vmem:[%s1 + $0x8] sm:$0xff]
      %v371 = vld [vmem:[%s1 + $0x10] sm:$0xf]
      %vm372 = vcmask 162816
      %v374 = vsel %vm372, %v369, 0
      %v377 = vsel %vm372, %v370, 0
      %v380 = vsel %vm372, %v371, 0
      %vm382 = vcmask 1043456
      %v384 = vsel %vm382, %v367, 0
      %v387 = vsel %vm382, %v368, 0
      %389 = vmatpush.msra.mxu0 0.0
      %390 = vmatpush.msra.mxu0 0.0
      %391 = vmatpush.msra.mxu0 0.0
      %392 = vmatpush.msra.mxu0 0.0
      %393 = vmatpush.msra.mxu0 0.0
      %394 = vmatpush.msra.mxu0 0.0
      %395 = vmatpush.msra.mxu0 0.0
      %396 = vmatpush.msra.mxu0 0.0
      %397 = vmatpush.msra.mxu0 0.0
      %398 = vmatpush.msra.mxu0 0.0
      %399 = vmatpush.msra.mxu0 0.0
      %400 = vmatpush.msra.mxu0 0.0
      %401 = vmatpush.msra.mxu0 0.0
      %402 = vmatpush.msra.mxu0 %v384
      %403 = vmatpush.msra.mxu0 %v365
      %404 = vmatpush.msra.mxu0 %v363
      %405 = vmatmul.f32.gmra.mxu0 %v374
      %v406 = vpop.f32.mrf.mxu0
      %v407 = vadd.f32 0.0, %v406
      %408 = vmatmul.f32.gmra.mxu0 %v377
      %v409 = vpop.f32.mrf.mxu0
      %v410 = vadd.f32 0.0, %v409
      %411 = vmatmul.f32.gmra.mxu0 %v380
      %v412 = vpop.f32.mrf.mxu0
      %v413 = vadd.f32 0.0, %v412
      %414 = vdwg.mxu0
      %415 = vmatpush.msra.mxu0 0.0
      %416 = vmatpush.msra.mxu0 0.0
      %417 = vmatpush.msra.mxu0 0.0
      %418 = vmatpush.msra.mxu0 0.0
      %419 = vmatpush.msra.mxu0 0.0
      %420 = vmatpush.msra.mxu0 0.0
      %421 = vmatpush.msra.mxu0 0.0
      %422 = vmatpush.msra.mxu0 0.0
      %423 = vmatpush.msra.mxu0 0.0
      %424 = vmatpush.msra.mxu0 0.0
      %425 = vmatpush.msra.mxu0 0.0
      %426 = vmatpush.msra.mxu0 0.0
      %427 = vmatpush.msra.mxu0 0.0
      %428 = vmatpush.msra.mxu0 %v387
      %429 = vmatpush.msra.mxu0 %v366
      %430 = vmatpush.msra.mxu0 %v364
      %431 = vmatmul.f32.gmra.mxu0 %v374
      %v432 = vpop.f32.mrf.mxu0
      %v433 = vadd.f32 0.0, %v432
      %434 = vmatmul.f32.gmra.mxu0 %v377
      %v435 = vpop.f32.mrf.mxu0
      %v436 = vadd.f32 0.0, %v435
      %437 = vmatmul.f32.gmra.mxu0 %v380
      %v438 = vpop.f32.mrf.mxu0
      %v439 = vadd.f32 0.0, %v438
      %440 = vdwg.mxu0
      %441 = vst [vmem:[#allocation3] sm:$0xff] %v407
      %vm442 = vcmask 23552
      %443 = vst.msk [vmem:[#allocation3 + $0x8] sm:$0xff] %vm442, %v433
      %444 = vst [vmem:[#allocation3 + $0x10] sm:$0xff] %v410
      %445 = vst.msk [vmem:[#allocation3 + $0x18] sm:$0xff] %vm442, %v436
      %446 = vst [vmem:[#allocation3 + $0x20] sm:$0xf] %v413
      %447 = vst.msk [vmem:[#allocation3 + $0x28] sm:$0xf] %vm361, %v439
      %s448 = smul.u32 %s23, 128
      %v449 = vlaneseq
      %v450 = vand.u32 %v449, 127
      %v451 = vstv %s448
      %v452 = vadd.s32 %v451, %v450
      %v453 = vadd.s32 %v452, 2
      %vm454 = vcmp.ge.s32.totalorder %v453, 0
      %vm455 = vcmp.le.s32.totalorder %v453, 32
      %vm456 = vmand %vm454, %vm455
      %v457 = vsel %vm456, 1, 0
      %v458 = vcvt.s32.f32 %v457
      %v459 = vld [vmem:[#allocation3] sm:$0x1f]
      %v460 = vld [vmem:[#allocation3 + $0x8] sm:$0x1f]
      %463 = vrot.lane.b32.xlu0 %v459, 125
      %v464 = vpop.permute.xlu0 %463
      %465 = vrot.lane.b32.xlu0 %v460, 125
      %v466 = vpop.permute.xlu0 %465
      %v467 = vsel %vm353, %v464, %v466
      %v469 = vmul.f32 %v458, %v467
      %v470 = vadd.f32 %v469, 0.0
      %v471 = vld [vmem:[%s6] sm:$0x1f]
      %473 = vset.pattern.permute.xlu0 0
      %474 = vperm.xlu0 %473, %v471
      %v475 = vpop.permute.xlu0 %474
      %v477 = vmul.f32 %v458, %v475
      %v478 = vadd.f32 %v477, 0.0
      %v479 = vadd.s32 %v452, 1
      %vm480 = vcmp.ge.s32.totalorder %v479, 0
      %vm481 = vcmp.le.s32.totalorder %v479, 32
      %vm482 = vmand %vm480, %vm481
      %v483 = vsel %vm482, 1, 0
      %v484 = vcvt.s32.f32 %v483
      %v485 = vld [vmem:[#allocation3] sm:$0xe0]
      %v486 = vld [vmem:[#allocation3 + $0x8] sm:$0xe0]
      %v487 = vld [vmem:[#allocation3 + $0x10] sm:$0x3]
      %v488 = vld [vmem:[#allocation3 + $0x18] sm:$0x3]
      %vm493 = vcmask 1042432
      %v494 = vrot.slane %v485, 5
      %v495 = vrot.slane %v487, 5
      %v496 = vsel %vm493, %v494, %v495
      %v497 = vrot.slane %v486, 5
      %v498 = vrot.slane %v488, 5
      %v499 = vsel %vm493, %v497, %v498
      %500 = vrot.lane.b32.xlu0 %v496, 126
      %v501 = vpop.permute.xlu0 %500
      %502 = vrot.lane.b32.xlu0 %v499, 126
      %v503 = vpop.permute.xlu0 %502
      %v504 = vsel %vm340, %v501, %v503
      %v506 = vmul.f32 %v484, %v504
      %v507 = vadd.f32 %v470, %v506
      %s508 = scalar_lea.vmem %s6, 8
      %v509 = vld [vmem:[%s508] sm:$0x1f]
      %511 = vset.pattern.permute.xlu0 0
      %512 = vperm.xlu0 %511, %v509
      %v513 = vpop.permute.xlu0 %512
      %v515 = vmul.f32 %v484, %v513
      %v516 = vadd.f32 %v478, %v515
      %vm517 = vcmp.ge.s32.totalorder %v452, 0
      %vm518 = vcmp.le.s32.totalorder %v452, 32
      %vm519 = vmand %vm517, %vm518
      %v520 = vsel %vm519, 1, 0
      %v521 = vcvt.s32.f32 %v520
      %v522 = vld [vmem:[#allocation3 + $0x10] sm:$0x7c]
      %v523 = vld [vmem:[#allocation3 + $0x18] sm:$0x7c]
      %v526 = vrot.slane %v522, 2
      %v527 = vrot.slane %v523, 2
      %528 = vrot.lane.b32.xlu0 %v526, 127
      %v529 = vpop.permute.xlu0 %528
      %530 = vrot.lane.b32.xlu0 %v527, 127
      %v531 = vpop.permute.xlu0 %530
      %v532 = vsel %vm324, %v529, %v531
      %v534 = vmul.f32 %v521, %v532
      %v535 = vadd.f32 %v507, %v534
      %s536 = scalar_lea.vmem %s6, 16
      %v537 = vld [vmem:[%s536] sm:$0x1f]
      %539 = vset.pattern.permute.xlu0 0
      %540 = vperm.xlu0 %539, %v537
      %v541 = vpop.permute.xlu0 %540
      %v543 = vmul.f32 %v521, %v541
      %v544 = vadd.f32 %v516, %v543
      %v545 = vadd.s32 %v452, 4294967295
      %vm546 = vcmp.ge.s32.totalorder %v545, 0
      %vm547 = vcmp.le.s32.totalorder %v545, 32
      %vm548 = vmand %vm546, %vm547
      %v549 = vsel %vm548, 1, 0
      %v550 = vcvt.s32.f32 %v549
      %v551 = vld [vmem:[#allocation3 + $0x10] sm:$0x80]
      %v552 = vld [vmem:[#allocation3 + $0x20] sm:$0xf]
      %v553 = vmul.f32 %v550, %v551
      %v554 = vmul.f32 %v550, %v552
      %vm557 = vcmask 1040384
      %v558 = vrot.slane %v553, 7
      %v559 = vrot.slane %v554, 7
      %v560 = vsel %vm557, %v558, %v559
      %v562 = vadd.f32 %v535, %v560
      %s563 = scalar_lea.vmem %s6, 24
      %v564 = vld [vmem:[%s563] sm:$0x1f]
      %566 = vset.pattern.permute.xlu0 0
      %567 = vperm.xlu0 %566, %v564
      %v568 = vpop.permute.xlu0 %567
      %v570 = vmul.f32 %v550, %v568
      %v571 = vadd.f32 %v544, %v570
      %vm572 = vcmp.gt.f32.partialorder %v571, 1e-08
      %v573 = vrcp.pop %v571
      %v574 = vmul.f32 %v571, %v573
      %v575 = vsub.f32 1.0, %v574
      %v576 = vmul.f32 %v573, %v575
      %v577 = vadd.f32 %v573, %v576
      %vm578 = vweird.f32 %v571
      %vm579 = vweird.f32 %v573
      %vm580 = vmor %vm578, %vm579
      %v581 = vsel %vm580, %v573, %v577
      %v582 = vand.u32 2147483647, %v571
      %vm583 = vcmp.eq.f32.partialorder %v582, 8.507059e+37
      %v584 = vand.u32 %v571, 2147483648
      %v585 = vor.u32 1.1754944e-38, %v584
      %v586 = vsel %vm583, %v585, %v581
      %v587 = vmul.f32 1.0, %v586
      %v588 = vsel %vm572, %v587, 0.0
      %v589 = vmul.f32 %v562, %v588
      %590 = vst [vmem:[%s310] sm:$0x1f] %v589
      %p591 = scmp.lt.s32.totalorder %s22, 1
      %s592 = scalar_select %p591, %s22, 1
      %p593 = scmp.lt.s32.totalorder %s23, 0
      %s594 = scalar_select %p593, %s23, 0
      %s595 = sadd.s32 %s594, %s592
      %s596 = smul.addr %s595, 8
      %s597 = scalar_lea.vmem %s7, %s596
      // Predicated region
      $region49: #{torch_stft2d_forward.1} parent=47 // pred_check
        %p598 = pneg %p204
      $region50: #{torch_stft2d_forward.1} parent=47 // pred_check_branch
        %600 = sbr.rel (%p598) target = $region52
      $region51: #{torch_stft2d_forward.1} parent=47 // pred_region
        _
      $region52: #{torch_stft2d_forward.1} parent=47 // pred_fallthru
        _
    $region48: #{torch_stft2d_forward.1} parent=5 // pred_fallthru
      _
    %p601 = scmp.le.s32.totalorder 2, %s13
    // Predicated region
    $region53: #{torch_stft2d_forward.1} parent=5 // pred_check
      %p602 = pneg %p601
    $region54: #{torch_stft2d_forward.1} parent=5 // pred_check_branch
      %604 = sbr.rel (%p602) target = $region56
    $region55: #{torch_stft2d_forward.1} parent=5 // pred_region
      %s605 = ssub.s32 %s13, 2
      // Predicated region
      $region57: #{torch_stft2d_forward.1} parent=55 // pred_check
        %p606 = pneg %p210
      $region58: #{torch_stft2d_forward.1} parent=55 // pred_check_branch
        %608 = sbr.rel (%p606) target = $region60
      $region59: #{torch_stft2d_forward.1} parent=55 // pred_region
        %p609 = scmp.lt.s32.totalorder %s24, 1
        %s610 = scalar_select %p609, %s24, 1
        %p611 = scmp.lt.s32.totalorder %s25, 0
        %s612 = scalar_select %p611, %s25, 0
        %s613 = sadd.s32 %s612, %s610
        %s614 = smul.addr %s613, 8
        %s615 = scalar_lea.vmem %s7, %s614
      $region60: #{torch_stft2d_forward.1} parent=55 // pred_fallthru
        _
    $region56: #{torch_stft2d_forward.1} parent=5 // pred_fallthru
      _
  $region6: #{torch_stft2d_forward.1} parent=0 // loop_footer
    %s17 = sadd.s32 1, %s13
  $region7: #{torch_stft2d_forward.1} parent=0 // loop_footer_branch
    %12 = sbr.rel target = $region3
  $region8: #{torch_stft2d_forward.1} parent=0 // loop_exit
    _

</llo_original>
